<compile_context>
chip_gen: v7x
topology: tpu7x:2x2x1
jax: 0.10.0
libtpu: 0.0.40
codegen_flags: <defaults>
</compile_context>

<pallas_src>
import functools

import jax
import jax.numpy as jnp
from jax.experimental import pallas as pl
from jax.experimental.pallas import tpu as pltpu


def _round_up(x, m):
    return ((x + m - 1) // m) * m


def mlp_kernel(x_ref, w1_ref, b1_ref, w2_ref, b2_ref, w3_ref, o_ref):
    # In-kernel cast of the activation tile to bf16 (saves a wrapper HBM roundtrip).
    x = x_ref[...].astype(w1_ref.dtype)

    # Layer 1: Linear(784 -> H) + ReLU.  bf16 MXU inputs, f32 accumulation.
    h1 = jnp.dot(x, w1_ref[...], preferred_element_type=jnp.float32)
    h1 = jnp.maximum(h1 + b1_ref[...], 0.0)          # f32 epilogue (v5e-safe)

    # Layer 2: Linear(H -> H) + ReLU.
    h2 = jnp.dot(h1.astype(w2_ref.dtype), w2_ref[...],
                 preferred_element_type=jnp.float32)
    h2 = jnp.maximum(h2 + b2_ref[...], 0.0)

    # Layer 3: Linear(H -> C), no bias.  Output tile is lane-dense (C_pad=128), bf16.
    out = jnp.dot(h2.astype(w3_ref.dtype), w3_ref[...],
                  preferred_element_type=jnp.float32)
    o_ref[...] = out.astype(o_ref.dtype)


def prepare_params(w1, b1, w2, b2, w3, mxu_dtype=jnp.bfloat16):
    """Pad hidden/class dims to lane multiples (128) and cast weights to bf16, ONCE.

    Zero padding keeps the math exact: padded hidden columns have zero weights
    and zero bias, so ReLU(0)=0 and they contribute nothing downstream; padded
    class columns have zero weights and are sliced off."""
    n_in, n_hidden = w1.shape
    n_class = w3.shape[1]
    H = _round_up(n_hidden, 128)   # 32  -> 128
    C = _round_up(n_class, 128)    # 10  -> 128
    w1p = jnp.zeros((n_in, H), mxu_dtype).at[:, :n_hidden].set(w1.astype(mxu_dtype))
    b1p = jnp.zeros((1, H), jnp.float32).at[:, :n_hidden].set(b1.astype(jnp.float32))
    w2p = jnp.zeros((H, H), mxu_dtype).at[:n_hidden, :n_hidden].set(w2.astype(mxu_dtype))
    b2p = jnp.zeros((1, H), jnp.float32).at[:, :n_hidden].set(b2.astype(jnp.float32))
    w3p = jnp.zeros((H, C), mxu_dtype).at[:n_hidden, :n_class].set(w3.astype(mxu_dtype))
    return (w1p, b1p, w2p, b2p, w3p)


@functools.partial(jax.jit, static_argnames=("n_class", "block_b"))
def mlp_forward(x, params, n_class, *, block_b=512):
    """x: [B, 784] f32; params: pre-padded (w1p, b1p, w2p, b2p, w3p) from prepare_params."""
    w1p, b1p, w2p, b2p, w3p = params
    B, n_in = x.shape
    H = w1p.shape[1]
    C = w3p.shape[1]

    # Adaptive batch tile: multiple of 8, no bigger than needed for small B.
    TB = min(block_b, _round_up(B, 8))
    # v7x megacore: if the whole batch fits in one step but is splittable,
    # halve TB so the "parallel" grid axis has >= 2 steps (both TensorCores busy).
    if _round_up(B, TB) // TB < 2 and TB >= 16 and TB % 16 == 0:
        TB //= 2
    B_pad = _round_up(B, TB)

    # Row-pad only when needed (no copy in the common aligned case).
    xp = x if B_pad == B else jnp.pad(x, ((0, B_pad - B), (0, 0)))

    const = lambda shape: pl.BlockSpec(shape, lambda i: (0, 0))

    flops = 2 * B_pad * (n_in * H + H * H + H * C)
    bytes_accessed = (
        xp.size * xp.dtype.itemsize
        + sum(p.size * p.dtype.itemsize for p in params)
        + B_pad * C * 2   # bf16 output writeback
    )

    out_padded = pl.pallas_call(
        mlp_kernel,
        out_shape=jax.ShapeDtypeStruct((B_pad, C), jnp.bfloat16),
        grid=(B_pad // TB,),
        in_specs=[
            pl.BlockSpec((TB, n_in), lambda i: (i, 0)),  # activations: tiled over batch
            const((n_in, H)),                            # weights/biases: VMEM-resident
            const((1, H)),
            const((H, H)),
            const((1, H)),
            const((H, C)),
        ],
        out_specs=pl.BlockSpec((TB, C), lambda i: (i, 0)),
        compiler_params=pltpu.CompilerParams(
            dimension_semantics=("parallel",)),          # megacore sharding on v7x
        cost_estimate=pl.CostEstimate(
            flops=flops, transcendentals=0, bytes_accessed=bytes_accessed),
    )(xp, w1p, b1p, w2p, b2p, w3p)

    # NOTE: padded batch rows (if any) contain ReLU(bias) garbage — always slice.
    return out_padded[:B, :n_class].astype(jnp.float32)


def init_params(key, n_in, n_hidden, n_class):
    """Deterministic init mimicking nn.Linear's uniform(-1/sqrt(fan_in), 1/sqrt(fan_in)).
    Weights returned pre-transposed as [in, out]; biases as [1, out]."""
    k1, k2, k3, k4, k5 = jax.random.split(key, 5)
    s1 = 1.0 / jnp.sqrt(n_in)
    s2 = 1.0 / jnp.sqrt(n_hidden)
    w1 = jax.random.uniform(k1, (n_in, n_hidden), jnp.float32, -s1, s1)
    b1 = jax.random.uniform(k2, (1, n_hidden), jnp.float32, -s1, s1)
    w2 = jax.random.uniform(k3, (n_hidden, n_hidden), jnp.float32, -s2, s2)
    b2 = jax.random.uniform(k4, (1, n_hidden), jnp.float32, -s2, s2)
    w3 = jax.random.uniform(k5, (n_hidden, n_class), jnp.float32, -s2, s2)
    return w1, b1, w2, b2, w3


if __name__ == "__main__":
    B, N_IN, N_HIDDEN, N_CLASS = 8, 28 * 28, 32, 10

    key = jax.random.PRNGKey(0)
    kx, kp = jax.random.split(key)
    x = jax.random.normal(kx, (B, N_IN), dtype=jnp.float32)
    w1, b1, w2, b2, w3 = init_params(kp, N_IN, N_HIDDEN, N_CLASS)

    params = prepare_params(w1, b1, w2, b2, w3)   # pad/cast ONCE, outside the forward

    out = mlp_forward(x, params, N_CLASS)
    jax.block_until_ready(out)
    assert out.shape == (B, N_CLASS)

    # Reference mirroring the kernel's numerics (bf16 MXU inputs, f32 accumulation).
    bf = jnp.bfloat16
    ref = jnp.dot(x.astype(bf), w1.astype(bf), preferred_element_type=jnp.float32)
    ref = jnp.maximum(ref + b1, 0.0)
    ref = jnp.dot(ref.astype(bf), w2.astype(bf), preferred_element_type=jnp.float32)
    ref = jnp.maximum(ref + b2, 0.0)
    ref = jnp.dot(ref.astype(bf), w3.astype(bf), preferred_element_type=jnp.float32)
    # Kernel additionally rounds the stored output to bf16 -> slightly looser tol.
    assert jnp.allclose(out, ref, atol=2e-2, rtol=2e-2), \
        f"max abs err {jnp.max(jnp.abs(out - ref))}"

    # Loose sanity check against the pure-f32 reference (bf16 quantization error only).
    ref32 = jnp.maximum(x @ w1 + b1, 0.0)
    ref32 = jnp.maximum(ref32 @ w2 + b2, 0.0)
    ref32 = ref32 @ w3
    assert jnp.allclose(out, ref32, atol=5e-2, rtol=5e-2)

    print("KERNEL_OK")
</pallas_src>

<mosaic_0001>
module attributes {stable_mosaic.version = 11 : i64} {
  func.func @mlp_kernel(%arg0: i32, %arg1: memref<8x784xf32, #tpu.memory_space<vmem>>, %arg2: memref<784x128xbf16, #tpu.memory_space<vmem>>, %arg3: memref<1x128xf32, #tpu.memory_space<vmem>>, %arg4: memref<128x128xbf16, #tpu.memory_space<vmem>>, %arg5: memref<1x128xf32, #tpu.memory_space<vmem>>, %arg6: memref<128x128xbf16, #tpu.memory_space<vmem>>, %arg7: memref<8x128xbf16, #tpu.memory_space<vmem>>) attributes {dimension_semantics = [#tpu.dimension_semantics<parallel>], iteration_bounds = array<i64: 1>, scalar_prefetch = 0 : i64, scratch_operands = 0 : i64, tpu.core_type = #tpu.core_type<tc>, window_params = [{transform_indices = @transform_0, window_bounds = array<i64: 8, 784>}, {pipeline_mode = #tpu.pipeline_mode<synchronous>, transform_indices = @transform_1, window_bounds = array<i64: 784, 128>}, {pipeline_mode = #tpu.pipeline_mode<synchronous>, transform_indices = @transform_2, window_bounds = array<i64: 1, 128>}, {pipeline_mode = #tpu.pipeline_mode<synchronous>, transform_indices = @transform_3, window_bounds = array<i64: 128, 128>}, {pipeline_mode = #tpu.pipeline_mode<synchronous>, transform_indices = @transform_4, window_bounds = array<i64: 1, 128>}, {pipeline_mode = #tpu.pipeline_mode<synchronous>, transform_indices = @transform_5, window_bounds = array<i64: 128, 128>}, {transform_indices = @transform_6, window_bounds = array<i64: 8, 128>}]} {
    %c0 = arith.constant 0 : index
    %c0_0 = arith.constant 0 : index
    %0 = vector.load %arg1[%c0, %c0_0] : memref<8x784xf32, #tpu.memory_space<vmem>>, vector<8x784xf32>
    %1 = arith.truncf %0 : vector<8x784xf32> to vector<8x784xbf16>
    %c0_1 = arith.constant 0 : index
    %c0_2 = arith.constant 0 : index
    %2 = vector.load %arg2[%c0_1, %c0_2] : memref<784x128xbf16, #tpu.memory_space<vmem>>, vector<784x128xbf16>
    %cst = arith.constant dense<0.000000e+00> : vector<8x128xf32>
    %3 = tpu.matmul %1, %2, %cst {dimension_numbers = #tpu.dot_dimension_numbers<[1], [0], [0], [1], [0, 0, 1, 1], [], []>} : vector<8x784xbf16>, vector<784x128xbf16>, vector<8x128xf32> -> vector<8x128xf32>
    %c0_3 = arith.constant 0 : index
    %c0_4 = arith.constant 0 : index
    %4 = vector.load %arg3[%c0_3, %c0_4] : memref<1x128xf32, #tpu.memory_space<vmem>>, vector<1x128xf32>
    %5 = vector.broadcast %4 : vector<1x128xf32> to vector<8x128xf32>
    %6 = arith.addf %3, %5 : vector<8x128xf32>
    %cst_5 = arith.constant 0.000000e+00 : f32
    %7 = vector.broadcast %cst_5 : f32 to vector<8x128xf32>
    %8 = arith.maximumf %6, %7 : vector<8x128xf32>
    %9 = arith.truncf %8 : vector<8x128xf32> to vector<8x128xbf16>
    %c0_6 = arith.constant 0 : index
    %c0_7 = arith.constant 0 : index
    %10 = vector.load %arg4[%c0_6, %c0_7] : memref<128x128xbf16, #tpu.memory_space<vmem>>, vector<128x128xbf16>
    %cst_8 = arith.constant dense<0.000000e+00> : vector<8x128xf32>
    %11 = tpu.matmul %9, %10, %cst_8 {dimension_numbers = #tpu.dot_dimension_numbers<[1], [0], [0], [1], [0, 0, 1, 1], [], []>} : vector<8x128xbf16>, vector<128x128xbf16>, vector<8x128xf32> -> vector<8x128xf32>
    %c0_9 = arith.constant 0 : index
    %c0_10 = arith.constant 0 : index
    %12 = vector.load %arg5[%c0_9, %c0_10] : memref<1x128xf32, #tpu.memory_space<vmem>>, vector<1x128xf32>
    %13 = vector.broadcast %12 : vector<1x128xf32> to vector<8x128xf32>
    %14 = arith.addf %11, %13 : vector<8x128xf32>
    %cst_11 = arith.constant 0.000000e+00 : f32
    %15 = vector.broadcast %cst_11 : f32 to vector<8x128xf32>
    %16 = arith.maximumf %14, %15 : vector<8x128xf32>
    %17 = arith.truncf %16 : vector<8x128xf32> to vector<8x128xbf16>
    %c0_12 = arith.constant 0 : index
    %c0_13 = arith.constant 0 : index
    %18 = vector.load %arg6[%c0_12, %c0_13] : memref<128x128xbf16, #tpu.memory_space<vmem>>, vector<128x128xbf16>
    %cst_14 = arith.constant dense<0.000000e+00> : vector<8x128xf32>
    %19 = tpu.matmul %17, %18, %cst_14 {dimension_numbers = #tpu.dot_dimension_numbers<[1], [0], [0], [1], [0, 0, 1, 1], [], []>} : vector<8x128xbf16>, vector<128x128xbf16>, vector<8x128xf32> -> vector<8x128xf32>
    %20 = arith.truncf %19 : vector<8x128xf32> to vector<8x128xbf16>
    %c0_15 = arith.constant 0 : index
    %c0_16 = arith.constant 0 : index
    %21 = vector.load %arg7[%c0_15, %c0_16] : memref<8x128xbf16, #tpu.memory_space<vmem>>, vector<8x128xbf16>
    tpu.vector_store %arg7[%c0_15, %c0_16], %20 {strides = array<i32>} : memref<8x128xbf16, #tpu.memory_space<vmem>>, vector<8x128xbf16>,
    return
  }
  func.func @transform_0(%arg0: i32) -> (i32, i32) {
    %c0_i32 = arith.constant 0 : i32
    %c0_i32_0 = arith.constant 0 : i32
    return %arg0, %c0_i32 : i32, i32
  }
  func.func @transform_1(%arg0: i32) -> (i32, i32) {
    %c0_i32 = arith.constant 0 : i32
    %c0_i32_0 = arith.constant 0 : i32
    %c0_i32_1 = arith.constant 0 : i32
    return %c0_i32, %c0_i32_0 : i32, i32
  }
  func.func @transform_2(%arg0: i32) -> (i32, i32) {
    %c0_i32 = arith.constant 0 : i32
    %c0_i32_0 = arith.constant 0 : i32
    %c0_i32_1 = arith.constant 0 : i32
    return %c0_i32, %c0_i32_0 : i32, i32
  }
  func.func @transform_3(%arg0: i32) -> (i32, i32) {
    %c0_i32 = arith.constant 0 : i32
    %c0_i32_0 = arith.constant 0 : i32
    %c0_i32_1 = arith.constant 0 : i32
    return %c0_i32, %c0_i32_0 : i32, i32
  }
  func.func @transform_4(%arg0: i32) -> (i32, i32) {
    %c0_i32 = arith.constant 0 : i32
    %c0_i32_0 = arith.constant 0 : i32
    %c0_i32_1 = arith.constant 0 : i32
    return %c0_i32, %c0_i32_0 : i32, i32
  }
  func.func @transform_5(%arg0: i32) -> (i32, i32) {
    %c0_i32 = arith.constant 0 : i32
    %c0_i32_0 = arith.constant 0 : i32
    %c0_i32_1 = arith.constant 0 : i32
    return %c0_i32, %c0_i32_0 : i32, i32
  }
  func.func @transform_6(%arg0: i32) -> (i32, i32) {
    %c0_i32 = arith.constant 0 : i32
    %c0_i32_0 = arith.constant 0 : i32
    return %arg0, %c0_i32 : i32, i32
  }
}

</mosaic_0001>

<llo_original>
// kernel: mlp_forward.1
$region0: #{mlp_forward.1}
  #allocation0 [shape = 'u32[]', space=smem, size = 0x4, offset = 0x4, fixed_abs, tag = 'smem constant byte address 0x4 - core index']
  #allocation1 [shape = 'u32[144,128]{1,0:T(1,128)}', space=vmem, size = 0x12000, scoped, tag = 'internal scratch']
  %s0 = inlined_call_operand.hbm [shape: f32[8,784], index: 0, kind: input, shape index: {}]
  %s1 = inlined_call_operand.hbm [shape: bf16[784,128], index: 1, kind: input, shape index: {}]
  %s2 = inlined_call_operand.vmem [shape: f32[1,128], index: 2, kind: input, shape index: {}]
  %s3 = inlined_call_operand.hbm [shape: bf16[128,128], index: 3, kind: input, shape index: {}]
  %s4 = inlined_call_operand.vmem [shape: f32[1,128], index: 4, kind: input, shape index: {}]
  %s5 = inlined_call_operand.hbm [shape: bf16[128,128], index: 5, kind: input, shape index: {}]
  %s6 = inlined_call_operand.vmem [shape: bf16[8,128], index: 6, kind: output, shape index: {}]
  %s7 = sld [smem:[#allocation0]]
  $region50: #{mlp_forward.1} parent=0
    _
  %s9 = ssub.s32 1, %s7
  %s10 = scalar_select 0, %s9, %s7
  $region1: #{mlp_forward.1} parent=0
    #allocation2 [shape = 'u8[28672]{0}', space=vmem, size = 0x7000, scoped, tag = 'input window, operand 0, single buffered']
    #allocation3 [shape = 's32[1]{0}', space=sflag, size = 0x4, scoped, tag = 'scoped memory for mlp_forward.1']
    #allocation4 [shape = 'u8[200704]{0}', space=vmem, size = 0x31000, scoped, tag = 'input window, operand 1, single buffered']
    #allocation5 [shape = 's32[1]{0}', space=sflag, size = 0x4, scoped, tag = 'scoped memory for mlp_forward.1']
    #allocation6 [shape = 'u8[32768]{0}', space=vmem, size = 0x8000, scoped, tag = 'input window, operand 3, single buffered']
    #allocation7 [shape = 'u8[32768]{0}', space=vmem, size = 0x8000, scoped, tag = 'input window, operand 5, single buffered']
    #allocation8 [shape = 's32[1]{0}', space=sflag, size = 0x4, scoped, tag = 'scoped memory for mlp_forward.1']
    %11 = vsyncpa [#allocation3], 0
    %12 = vsyncpa [#allocation5], 0
    %13 = vsyncpa [#allocation8], 0
    // Predicated region
    $region2: #{mlp_forward.1} parent=1 // pred_check
      _
    $region3: #{mlp_forward.1} parent=1 // pred_check_branch
      %15 = sbr.rel (0) target = $region5
    $region4: #{mlp_forward.1} parent=1 // pred_region
      %s17 = ssub.s32 896, 896
      %18 = vsyncadd [#allocation3], %s17
      %s20 = sshll.u32 [#allocation2], 4
      %s21 = int_to_ptr.vmem [resolvable:$true] %s20
      %23 = dma.hbm_to_vmem [thread:$0]  %s0, 896, %s21, [#allocation3]
    $region5: #{mlp_forward.1} parent=1 // pred_fallthru
      _
    // Predicated region
    $region6: #{mlp_forward.1} parent=1 // pred_check
      _
    $region7: #{mlp_forward.1} parent=1 // pred_check_branch
      %25 = sbr.rel (0) target = $region9
    $region8: #{mlp_forward.1} parent=1 // pred_region
      %s27 = ssub.s32 6272, 6272
      %28 = vsyncadd [#allocation5], %s27
      %s29 = sshll.u32 [#allocation4], 4
      %s30 = int_to_ptr.vmem [resolvable:$true] %s29
      %35 = dma.hbm_to_vmem [thread:$0]  %s1, 6272, %s30, [#allocation5], 64, 64, 4
    $region9: #{mlp_forward.1} parent=1 // pred_fallthru
      _
    // Predicated region
    $region10: #{mlp_forward.1} parent=1 // pred_check
      _
    $region11: #{mlp_forward.1} parent=1 // pred_check_branch
      %37 = sbr.rel (0) target = $region13
    $region12: #{mlp_forward.1} parent=1 // pred_region
      _
    $region13: #{mlp_forward.1} parent=1 // pred_fallthru
      _
    // Predicated region
    $region14: #{mlp_forward.1} parent=1 // pred_check
      _
    $region15: #{mlp_forward.1} parent=1 // pred_check_branch
      %39 = sbr.rel (0) target = $region17
    $region16: #{mlp_forward.1} parent=1 // pred_region
      %s41 = ssub.s32 1024, 1024
      %42 = vsyncadd [#allocation5], %s41
      %s43 = sshll.u32 [#allocation6], 4
      %s44 = int_to_ptr.vmem [resolvable:$true] %s43
      %49 = dma.hbm_to_vmem [thread:$0]  %s3, 1024, %s44, [#allocation5], 64, 64, 4
    $region17: #{mlp_forward.1} parent=1 // pred_fallthru
      _
    // Predicated region
    $region18: #{mlp_forward.1} parent=1 // pred_check
      _
    $region19: #{mlp_forward.1} parent=1 // pred_check_branch
      %51 = sbr.rel (0) target = $region21
    $region20: #{mlp_forward.1} parent=1 // pred_region
      _
    $region21: #{mlp_forward.1} parent=1 // pred_fallthru
      _
    // Predicated region
    $region22: #{mlp_forward.1} parent=1 // pred_check
      _
    $region23: #{mlp_forward.1} parent=1 // pred_check_branch
      %53 = sbr.rel (0) target = $region25
    $region24: #{mlp_forward.1} parent=1 // pred_region
      %s55 = ssub.s32 1024, 1024
      %56 = vsyncadd [#allocation8], %s55
      %s57 = sshll.u32 [#allocation7], 4
      %s58 = int_to_ptr.vmem [resolvable:$true] %s57
      %63 = dma.hbm_to_vmem [thread:$0]  %s5, 1024, %s58, [#allocation8], 64, 64, 4
    $region25: #{mlp_forward.1} parent=1 // pred_fallthru
      _
    // Predicated region
    $region26: #{mlp_forward.1} parent=1 // pred_check
      _
    $region27: #{mlp_forward.1} parent=1 // pred_check_branch
      %65 = sbr.rel (0) target = $region29
    $region28: #{mlp_forward.1} parent=1 // pred_region
      %66 = dma.done [#allocation3], 896
    $region29: #{mlp_forward.1} parent=1 // pred_fallthru
      _
    // Predicated region
    $region30: #{mlp_forward.1} parent=1 // pred_check
      _
    $region31: #{mlp_forward.1} parent=1 // pred_check_branch
      %68 = sbr.rel (0) target = $region33
    $region32: #{mlp_forward.1} parent=1 // pred_region
      %69 = dma.done [#allocation5], 6272
    $region33: #{mlp_forward.1} parent=1 // pred_fallthru
      _
    // Predicated region
    $region34: #{mlp_forward.1} parent=1 // pred_check
      _
    $region35: #{mlp_forward.1} parent=1 // pred_check_branch
      %71 = sbr.rel (0) target = $region37
    $region36: #{mlp_forward.1} parent=1 // pred_region
      %72 = dma.done [#allocation5], 1024
    $region37: #{mlp_forward.1} parent=1 // pred_fallthru
      _
    // Predicated region
    $region38: #{mlp_forward.1} parent=1 // pred_check
      _
    $region39: #{mlp_forward.1} parent=1 // pred_check_branch
      %74 = sbr.rel (0) target = $region41
    $region40: #{mlp_forward.1} parent=1 // pred_region
      %75 = dma.done [#allocation8], 1024
    $region41: #{mlp_forward.1} parent=1 // pred_fallthru
      _
    %v77 = vld [vmem:[#allocation2] sm:$0xff]
    %v78 = vld [vmem:[#allocation2 + $0x8] sm:$0xff]
    %v79 = vld [vmem:[#allocation2 + $0x10] sm:$0xff]
    %v80 = vld [vmem:[#allocation2 + $0x18] sm:$0xff]
    %v81 = vld [vmem:[#allocation2 + $0x20] sm:$0xff]
    %v82 = vld [vmem:[#allocation2 + $0x28] sm:$0xff]
    %v83 = vld [vmem:[#allocation2 + $0x30] sm:$0xff]
    %v84 = vpack.c.bf16 %v77, %v77
    %v85 = vpack.c.bf16 %v78, %v78
    %v86 = vpack.c.bf16 %v79, %v79
    %v87 = vpack.c.bf16 %v80, %v80
    %v88 = vpack.c.bf16 %v81, %v81
    %v89 = vpack.c.bf16 %v82, %v82
    %v90 = vpack.c.bf16 %v83, %v83
    %v91 = vld [vmem:[#allocation4] sm:$0xf]
    %v92 = vld [vmem:[#allocation4 + $0x4] sm:$0xf]
    %v93 = vld [vmem:[#allocation4 + $0x8] sm:$0xf]
    %v94 = vld [vmem:[#allocation4 + $0xc] sm:$0xf]
    %v95 = vld [vmem:[#allocation4 + $0x10] sm:$0xf]
    %v96 = vld [vmem:[#allocation4 + $0x14] sm:$0xf]
    %v97 = vld [vmem:[#allocation4 + $0x18] sm:$0xf]
    %v98 = vld [vmem:[#allocation4 + $0x1c] sm:$0xf]
    %v99 = vld [vmem:[#allocation4 + $0x20] sm:$0xf]
    %v100 = vld [vmem:[#allocation4 + $0x24] sm:$0xf]
    %v101 = vld [vmem:[#allocation4 + $0x28] sm:$0xf]
    %v102 = vld [vmem:[#allocation4 + $0x2c] sm:$0xf]
    %v103 = vld [vmem:[#allocation4 + $0x30] sm:$0xf]
    %v104 = vld [vmem:[#allocation4 + $0x34] sm:$0xf]
    %v105 = vld [vmem:[#allocation4 + $0x38] sm:$0xf]
    %v106 = vld [vmem:[#allocation4 + $0x3c] sm:$0xf]
    %v107 = vld [vmem:[#allocation4 + $0x40] sm:$0xf]
    %v108 = vld [vmem:[#allocation4 + $0x44] sm:$0xf]
    %v109 = vld [vmem:[#allocation4 + $0x48] sm:$0xf]
    %v110 = vld [vmem:[#allocation4 + $0x4c] sm:$0xf]
    %v111 = vld [vmem:[#allocation4 + $0x50] sm:$0xf]
    %v112 = vld [vmem:[#allocation4 + $0x54] sm:$0xf]
    %v113 = vld [vmem:[#allocation4 + $0x58] sm:$0xf]
    %v114 = vld [vmem:[#allocation4 + $0x5c] sm:$0xf]
    %v115 = vld [vmem:[#allocation4 + $0x60] sm:$0xf]
    %v116 = vld [vmem:[#allocation4 + $0x64] sm:$0xf]
    %v117 = vld [vmem:[#allocation4 + $0x68] sm:$0xf]
    %v118 = vld [vmem:[#allocation4 + $0x6c] sm:$0xf]
    %v119 = vld [vmem:[#allocation4 + $0x70] sm:$0xf]
    %v120 = vld [vmem:[#allocation4 + $0x74] sm:$0xf]
    %v121 = vld [vmem:[#allocation4 + $0x78] sm:$0xf]
    %v122 = vld [vmem:[#allocation4 + $0x7c] sm:$0xf]
    %v123 = vld [vmem:[#allocation4 + $0x80] sm:$0xf]
    %v124 = vld [vmem:[#allocation4 + $0x84] sm:$0xf]
    %v125 = vld [vmem:[#allocation4 + $0x88] sm:$0xf]
    %v126 = vld [vmem:[#allocation4 + $0x8c] sm:$0xf]
    %v127 = vld [vmem:[#allocation4 + $0x90] sm:$0xf]
    %v128 = vld [vmem:[#allocation4 + $0x94] sm:$0xf]
    %v129 = vld [vmem:[#allocation4 + $0x98] sm:$0xf]
    %v130 = vld [vmem:[#allocation4 + $0x9c] sm:$0xf]
    %v131 = vld [vmem:[#allocation4 + $0xa0] sm:$0xf]
    %v132 = vld [vmem:[#allocation4 + $0xa4] sm:$0xf]
    %v133 = vld [vmem:[#allocation4 + $0xa8] sm:$0xf]
    %v134 = vld [vmem:[#allocation4 + $0xac] sm:$0xf]
    %v135 = vld [vmem:[#allocation4 + $0xb0] sm:$0xf]
    %v136 = vld [vmem:[#allocation4 + $0xb4] sm:$0xf]
    %v137 = vld [vmem:[#allocation4 + $0xb8] sm:$0xf]
    %v138 = vld [vmem:[#allocation4 + $0xbc] sm:$0xf]
    %v139 = vld [vmem:[#allocation4 + $0xc0] sm:$0xf]
    %v140 = vld [vmem:[#allocation4 + $0xc4] sm:$0xf]
    %v141 = vld [vmem:[#allocation4 + $0xc8] sm:$0xf]
    %v142 = vld [vmem:[#allocation4 + $0xcc] sm:$0xf]
    %v143 = vld [vmem:[#allocation4 + $0xd0] sm:$0xf]
    %v144 = vld [vmem:[#allocation4 + $0xd4] sm:$0xf]
    %v145 = vld [vmem:[#allocation4 + $0xd8] sm:$0xf]
    %v146 = vld [vmem:[#allocation4 + $0xdc] sm:$0xf]
    %v147 = vld [vmem:[#allocation4 + $0xe0] sm:$0xf]
    %v148 = vld [vmem:[#allocation4 + $0xe4] sm:$0xf]
    %v149 = vld [vmem:[#allocation4 + $0xe8] sm:$0xf]
    %v150 = vld [vmem:[#allocation4 + $0xec] sm:$0xf]
    %v151 = vld [vmem:[#allocation4 + $0xf0] sm:$0xf]
    %v152 = vld [vmem:[#allocation4 + $0xf4] sm:$0xf]
    %v153 = vld [vmem:[#allocation4 + $0xf8] sm:$0xf]
    %v154 = vld [vmem:[#allocation4 + $0xfc] sm:$0xf]
    %v155 = vld [vmem:[#allocation4 + $0x100] sm:$0xf]
    %v156 = vld [vmem:[#allocation4 + $0x104] sm:$0xf]
    %v157 = vld [vmem:[#allocation4 + $0x108] sm:$0xf]
    %v158 = vld [vmem:[#allocation4 + $0x10c] sm:$0xf]
    %v159 = vld [vmem:[#allocation4 + $0x110] sm:$0xf]
    %v160 = vld [vmem:[#allocation4 + $0x114] sm:$0xf]
    %v161 = vld [vmem:[#allocation4 + $0x118] sm:$0xf]
    %v162 = vld [vmem:[#allocation4 + $0x11c] sm:$0xf]
    %v163 = vld [vmem:[#allocation4 + $0x120] sm:$0xf]
    %v164 = vld [vmem:[#allocation4 + $0x124] sm:$0xf]
    %v165 = vld [vmem:[#allocation4 + $0x128] sm:$0xf]
    %v166 = vld [vmem:[#allocation4 + $0x12c] sm:$0xf]
    %v167 = vld [vmem:[#allocation4 + $0x130] sm:$0xf]
    %v168 = vld [vmem:[#allocation4 + $0x134] sm:$0xf]
    %v169 = vld [vmem:[#allocation4 + $0x138] sm:$0xf]
    %v170 = vld [vmem:[#allocation4 + $0x13c] sm:$0xf]
    %v171 = vld [vmem:[#allocation4 + $0x140] sm:$0xf]
    %v172 = vld [vmem:[#allocation4 + $0x144] sm:$0xf]
    %v173 = vld [vmem:[#allocation4 + $0x148] sm:$0xf]
    %v174 = vld [vmem:[#allocation4 + $0x14c] sm:$0xf]
    %v175 = vld [vmem:[#allocation4 + $0x150] sm:$0xf]
    %v176 = vld [vmem:[#allocation4 + $0x154] sm:$0xf]
    %v177 = vld [vmem:[#allocation4 + $0x158] sm:$0xf]
    %v178 = vld [vmem:[#allocation4 + $0x15c] sm:$0xf]
    %v179 = vld [vmem:[#allocation4 + $0x160] sm:$0xf]
    %v180 = vld [vmem:[#allocation4 + $0x164] sm:$0xf]
    %v181 = vld [vmem:[#allocation4 + $0x168] sm:$0xf]
    %v182 = vld [vmem:[#allocation4 + $0x16c] sm:$0xf]
    %v183 = vld [vmem:[#allocation4 + $0x170] sm:$0xf]
    %v184 = vld [vmem:[#allocation4 + $0x174] sm:$0xf]
    %v185 = vld [vmem:[#allocation4 + $0x178] sm:$0xf]
    %v186 = vld [vmem:[#allocation4 + $0x17c] sm:$0xf]
    %v187 = vld [vmem:[#allocation4 + $0x180] sm:$0xf]
    %v188 = vld [vmem:[#allocation4 + $0x184] sm:$0xf]
    %v189 = vld [vmem:[%s2] sm:$0x1]
    %v191 = vlaneseq
    %v192 = vshrl.u32 %v191, 7
    %v193 = vsub.s32 0, %v192
    %v194 = vrot.slane %v189, %v193
    %v294 = vunpack.c.l.b16 %v91
    %v295 = vunpack.c.l.b16 %v92
    %v296 = vunpack.c.l.b16 %v93
    %v297 = vunpack.c.l.b16 %v94
    %v298 = vunpack.c.l.b16 %v95
    %v299 = vunpack.c.l.b16 %v96
    %v300 = vunpack.c.l.b16 %v97
    %v301 = vunpack.c.l.b16 %v98
    %v302 = vunpack.c.l.b16 %v99
    %v303 = vunpack.c.l.b16 %v100
    %v304 = vunpack.c.l.b16 %v101
    %v305 = vunpack.c.l.b16 %v102
    %v306 = vunpack.c.l.b16 %v103
    %v307 = vunpack.c.l.b16 %v104
    %v308 = vunpack.c.l.b16 %v105
    %v309 = vunpack.c.l.b16 %v106
    %v310 = vunpack.c.l.b16 %v107
    %v311 = vunpack.c.l.b16 %v108
    %v312 = vunpack.c.l.b16 %v109
    %v313 = vunpack.c.l.b16 %v110
    %v314 = vunpack.c.l.b16 %v111
    %v315 = vunpack.c.l.b16 %v112
    %v316 = vunpack.c.l.b16 %v113
    %v317 = vunpack.c.l.b16 %v114
    %v318 = vunpack.c.l.b16 %v115
    %v319 = vunpack.c.l.b16 %v116
    %v320 = vunpack.c.l.b16 %v117
    %v321 = vunpack.c.l.b16 %v118
    %v322 = vunpack.c.l.b16 %v119
    %v323 = vunpack.c.l.b16 %v120
    %v324 = vunpack.c.l.b16 %v121
    %v325 = vunpack.c.l.b16 %v122
    %v326 = vunpack.c.l.b16 %v123
    %v327 = vunpack.c.l.b16 %v124
    %v328 = vunpack.c.l.b16 %v125
    %v329 = vunpack.c.l.b16 %v126
    %v330 = vunpack.c.l.b16 %v127
    %v331 = vunpack.c.l.b16 %v128
    %v332 = vunpack.c.l.b16 %v129
    %v333 = vunpack.c.l.b16 %v130
    %v334 = vunpack.c.l.b16 %v131
    %v335 = vunpack.c.l.b16 %v132
    %v336 = vunpack.c.l.b16 %v133
    %v337 = vunpack.c.l.b16 %v134
    %v338 = vunpack.c.l.b16 %v135
    %v339 = vunpack.c.l.b16 %v136
    %v340 = vunpack.c.l.b16 %v137
    %v341 = vunpack.c.l.b16 %v138
    %v342 = vunpack.c.l.b16 %v139
    %v343 = vunpack.c.l.b16 %v140
    %v344 = vunpack.c.l.b16 %v141
    %v345 = vunpack.c.l.b16 %v142
    %v346 = vunpack.c.l.b16 %v143
    %v347 = vunpack.c.l.b16 %v144
    %v348 = vunpack.c.l.b16 %v145
    %v349 = vunpack.c.l.b16 %v146
    %v350 = vunpack.c.l.b16 %v147
    %v351 = vunpack.c.l.b16 %v148
    %v352 = vunpack.c.l.b16 %v149
    %v353 = vunpack.c.l.b16 %v150
    %v354 = vunpack.c.l.b16 %v151
    %v355 = vunpack.c.l.b16 %v152
    %v356 = vunpack.c.l.b16 %v153
    %v357 = vunpack.c.l.b16 %v154
    %v358 = vunpack.c.l.b16 %v155
    %v359 = vunpack.c.l.b16 %v156
    %v360 = vunpack.c.l.b16 %v157
    %v361 = vunpack.c.l.b16 %v158
    %v362 = vunpack.c.l.b16 %v159
    %v363 = vunpack.c.l.b16 %v160
    %v364 = vunpack.c.l.b16 %v161
    %v365 = vunpack.c.l.b16 %v162
    %v366 = vunpack.c.l.b16 %v163
    %v367 = vunpack.c.l.b16 %v164
    %v368 = vunpack.c.l.b16 %v165
    %v369 = vunpack.c.l.b16 %v166
    %v370 = vunpack.c.l.b16 %v167
    %v371 = vunpack.c.l.b16 %v168
    %v372 = vunpack.c.l.b16 %v169
    %v373 = vunpack.c.l.b16 %v170
    %v374 = vunpack.c.l.b16 %v171
    %v375 = vunpack.c.l.b16 %v172
    %v376 = vunpack.c.l.b16 %v173
    %v377 = vunpack.c.l.b16 %v174
    %v378 = vunpack.c.l.b16 %v175
    %v379 = vunpack.c.l.b16 %v176
    %v380 = vunpack.c.l.b16 %v177
    %v381 = vunpack.c.l.b16 %v178
    %v382 = vunpack.c.l.b16 %v179
    %v383 = vunpack.c.l.b16 %v180
    %v384 = vunpack.c.l.b16 %v181
    %v385 = vunpack.c.l.b16 %v182
    %v386 = vunpack.c.l.b16 %v183
    %v387 = vunpack.c.l.b16 %v184
    %v388 = vunpack.c.l.b16 %v185
    %v389 = vunpack.c.l.b16 %v186
    %v390 = vunpack.c.l.b16 %v187
    %v391 = vunpack.c.l.b16 %v188
    %v392 = vpack.c.b16 %v295, %v294
    %v393 = vpack.c.b16 %v297, %v296
    %v394 = vpack.c.b16 %v299, %v298
    %v395 = vpack.c.b16 %v301, %v300
    %v396 = vpack.c.b16 %v303, %v302
    %v397 = vpack.c.b16 %v305, %v304
    %v398 = vpack.c.b16 %v307, %v306
    %v399 = vpack.c.b16 %v309, %v308
    %v400 = vpack.c.b16 %v311, %v310
    %v401 = vpack.c.b16 %v313, %v312
    %v402 = vpack.c.b16 %v315, %v314
    %v403 = vpack.c.b16 %v317, %v316
    %v404 = vpack.c.b16 %v319, %v318
    %v405 = vpack.c.b16 %v321, %v320
    %v406 = vpack.c.b16 %v323, %v322
    %v407 = vpack.c.b16 %v325, %v324
    %v408 = vpack.c.b16 %v327, %v326
    %v409 = vpack.c.b16 %v329, %v328
    %v410 = vpack.c.b16 %v331, %v330
    %v411 = vpack.c.b16 %v333, %v332
    %v412 = vpack.c.b16 %v335, %v334
    %v413 = vpack.c.b16 %v337, %v336
    %v414 = vpack.c.b16 %v339, %v338
    %v415 = vpack.c.b16 %v341, %v340
    %v416 = vpack.c.b16 %v343, %v342
    %v417 = vpack.c.b16 %v345, %v344
    %v418 = vpack.c.b16 %v347, %v346
    %v419 = vpack.c.b16 %v349, %v348
    %v420 = vpack.c.b16 %v351, %v350
    %v421 = vpack.c.b16 %v353, %v352
    %v422 = vpack.c.b16 %v355, %v354
    %v423 = vpack.c.b16 %v357, %v356
    %v424 = vpack.c.b16 %v359, %v358
    %v425 = vpack.c.b16 %v361, %v360
    %v426 = vpack.c.b16 %v363, %v362
    %v427 = vpack.c.b16 %v365, %v364
    %v428 = vpack.c.b16 %v367, %v366
    %v429 = vpack.c.b16 %v369, %v368
    %v430 = vpack.c.b16 %v371, %v370
    %v431 = vpack.c.b16 %v373, %v372
    %v432 = vpack.c.b16 %v375, %v374
    %v433 = vpack.c.b16 %v377, %v376
    %v434 = vpack.c.b16 %v379, %v378
    %v435 = vpack.c.b16 %v381, %v380
    %v436 = vpack.c.b16 %v383, %v382
    %v437 = vpack.c.b16 %v385, %v384
    %v438 = vpack.c.b16 %v387, %v386
    %v439 = vpack.c.b16 %v389, %v388
    %v440 = vpack.c.b16 %v391, %v390
    %vm490 = vcmask 130048
    %v492 = vsel %vm490, %v90, 0
    %494 = vmatprep.subr.bf16.mxu0 0
    %495 = vmatpush1.bf16.msra.mxu0 %v392
    %496 = vmatprep.subr.bf16.mxu0 0
    %497 = vmatpush1.bf16.msra.mxu0 %v393
    %498 = vmatprep.subr.bf16.mxu0 0
    %499 = vmatpush1.bf16.msra.mxu0 %v394
    %500 = vmatprep.subr.bf16.mxu0 0
    %501 = vmatpush1.bf16.msra.mxu0 %v395
    %502 = vmatprep.subr.bf16.mxu0 0
    %503 = vmatpush1.bf16.msra.mxu0 %v396
    %504 = vmatprep.subr.bf16.mxu0 0
    %505 = vmatpush1.bf16.msra.mxu0 %v397
    %506 = vmatprep.subr.bf16.mxu0 0
    %507 = vmatpush1.bf16.msra.mxu0 %v398
    %508 = vmatprep.subr.bf16.mxu0 0
    %509 = vmatpush1.bf16.msra.mxu0 %v399
    %510 = vmatprep.subr.bf16.mxu0 0
    %511 = vmatpush1.bf16.msra.mxu0 %v400
    %512 = vmatprep.subr.bf16.mxu0 0
    %513 = vmatpush1.bf16.msra.mxu0 %v401
    %514 = vmatprep.subr.bf16.mxu0 0
    %515 = vmatpush1.bf16.msra.mxu0 %v402
    %516 = vmatprep.subr.bf16.mxu0 0
    %517 = vmatpush1.bf16.msra.mxu0 %v403
    %518 = vmatprep.subr.bf16.mxu0 0
    %519 = vmatpush1.bf16.msra.mxu0 %v404
    %520 = vmatprep.subr.bf16.mxu0 0
    %521 = vmatpush1.bf16.msra.mxu0 %v405
    %522 = vmatprep.subr.bf16.mxu0 0
    %523 = vmatpush1.bf16.msra.mxu0 %v406
    %524 = vmatprep.subr.bf16.mxu0 0
    %525 = vmatpush1.bf16.msra.mxu0 %v407
    %526 = vmatprep.mubr.bf16.mxu0 %v85
    %527 = vmatmul.mubr.bf16.gmra.mrb[0].mxu0 %v84
    %v528 = vpop.f32.mrb[0].mxu0
    %v529 = vadd.f32 %v194, %v528
    %v530 = vpop.f32.mrb[0].mxu0
    %v531 = vpop.f32.mrb[0].mxu0
    %v532 = vpop.f32.mrb[0].mxu0
    %533 = vdwg.mxu0
    %534 = vmatprep.subr.bf16.mxu0 0
    %535 = vmatpush1.bf16.msra.mxu0 %v408
    %536 = vmatprep.subr.bf16.mxu0 0
    %537 = vmatpush1.bf16.msra.mxu0 %v409
    %538 = vmatprep.subr.bf16.mxu0 0
    %539 = vmatpush1.bf16.msra.mxu0 %v410
    %540 = vmatprep.subr.bf16.mxu0 0
    %541 = vmatpush1.bf16.msra.mxu0 %v411
    %542 = vmatprep.subr.bf16.mxu0 0
    %543 = vmatpush1.bf16.msra.mxu0 %v412
    %544 = vmatprep.subr.bf16.mxu0 0
    %545 = vmatpush1.bf16.msra.mxu0 %v413
    %546 = vmatprep.subr.bf16.mxu0 0
    %547 = vmatpush1.bf16.msra.mxu0 %v414
    %548 = vmatprep.subr.bf16.mxu0 0
    %549 = vmatpush1.bf16.msra.mxu0 %v415
    %550 = vmatprep.subr.bf16.mxu0 0
    %551 = vmatpush1.bf16.msra.mxu0 %v416
    %552 = vmatprep.subr.bf16.mxu0 0
    %553 = vmatpush1.bf16.msra.mxu0 %v417
    %554 = vmatprep.subr.bf16.mxu0 0
    %555 = vmatpush1.bf16.msra.mxu0 %v418
    %556 = vmatprep.subr.bf16.mxu0 0
    %557 = vmatpush1.bf16.msra.mxu0 %v419
    %558 = vmatprep.subr.bf16.mxu0 0
    %559 = vmatpush1.bf16.msra.mxu0 %v420
    %560 = vmatprep.subr.bf16.mxu0 0
    %561 = vmatpush1.bf16.msra.mxu0 %v421
    %562 = vmatprep.subr.bf16.mxu0 0
    %563 = vmatpush1.bf16.msra.mxu0 %v422
    %564 = vmatprep.subr.bf16.mxu0 0
    %565 = vmatpush1.bf16.msra.mxu0 %v423
    %566 = vmatprep.mubr.bf16.mxu0 %v87
    %567 = vmatmul.mubr.bf16.gmra.mrb[0].mxu0 %v86
    %v568 = vpop.f32.mrb[0].mxu0
    %v569 = vadd.f32 %v529, %v568
    %v570 = vpop.f32.mrb[0].mxu0
    %v571 = vpop.f32.mrb[0].mxu0
    %v572 = vpop.f32.mrb[0].mxu0
    %573 = vdwg.mxu0
    %574 = vmatprep.subr.bf16.mxu0 0
    %575 = vmatpush1.bf16.msra.mxu0 %v424
    %576 = vmatprep.subr.bf16.mxu0 0
    %577 = vmatpush1.bf16.msra.mxu0 %v425
    %578 = vmatprep.subr.bf16.mxu0 0
    %579 = vmatpush1.bf16.msra.mxu0 %v426
    %580 = vmatprep.subr.bf16.mxu0 0
    %581 = vmatpush1.bf16.msra.mxu0 %v427
    %582 = vmatprep.subr.bf16.mxu0 0
    %583 = vmatpush1.bf16.msra.mxu0 %v428
    %584 = vmatprep.subr.bf16.mxu0 0
    %585 = vmatpush1.bf16.msra.mxu0 %v429
    %586 = vmatprep.subr.bf16.mxu0 0
    %587 = vmatpush1.bf16.msra.mxu0 %v430
    %588 = vmatprep.subr.bf16.mxu0 0
    %589 = vmatpush1.bf16.msra.mxu0 %v431
    %590 = vmatprep.subr.bf16.mxu0 0
    %591 = vmatpush1.bf16.msra.mxu0 %v432
    %592 = vmatprep.subr.bf16.mxu0 0
    %593 = vmatpush1.bf16.msra.mxu0 %v433
    %594 = vmatprep.subr.bf16.mxu0 0
    %595 = vmatpush1.bf16.msra.mxu0 %v434
    %596 = vmatprep.subr.bf16.mxu0 0
    %597 = vmatpush1.bf16.msra.mxu0 %v435
    %598 = vmatprep.subr.bf16.mxu0 0
    %599 = vmatpush1.bf16.msra.mxu0 %v436
    %600 = vmatprep.subr.bf16.mxu0 0
    %601 = vmatpush1.bf16.msra.mxu0 %v437
    %602 = vmatprep.subr.bf16.mxu0 0
    %603 = vmatpush1.bf16.msra.mxu0 %v438
    %604 = vmatprep.subr.bf16.mxu0 0
    %605 = vmatpush1.bf16.msra.mxu0 %v439
    %606 = vmatprep.mubr.bf16.mxu0 %v89
    %607 = vmatmul.mubr.bf16.gmra.mrb[0].mxu0 %v88
    %v608 = vpop.f32.mrb[0].mxu0
    %v609 = vadd.f32 %v569, %v608
    %v610 = vpop.f32.mrb[0].mxu0
    %v611 = vpop.f32.mrb[0].mxu0
    %v612 = vpop.f32.mrb[0].mxu0
    %613 = vdwg.mxu0
    %614 = vmatprep.subr.bf16.mxu0 0
    %615 = vmatpush1.bf16.msra.mxu0 %v440
    %616 = vmatprep.subr.bf16.mxu0 0
    %617 = vmatpush1.bf16.msra.mxu0 0
    %618 = vmatprep.subr.bf16.mxu0 0
    %619 = vmatpush1.bf16.msra.mxu0 0
    %620 = vmatprep.subr.bf16.mxu0 0
    %621 = vmatpush1.bf16.msra.mxu0 0
    %622 = vmatprep.subr.bf16.mxu0 0
    %623 = vmatpush1.bf16.msra.mxu0 0
    %624 = vmatprep.subr.bf16.mxu0 0
    %625 = vmatpush1.bf16.msra.mxu0 0
    %626 = vmatprep.subr.bf16.mxu0 0
    %627 = vmatpush1.bf16.msra.mxu0 0
    %628 = vmatprep.subr.bf16.mxu0 0
    %629 = vmatpush1.bf16.msra.mxu0 0
    %630 = vmatprep.subr.bf16.mxu0 0
    %631 = vmatpush1.bf16.msra.mxu0 0
    %632 = vmatprep.subr.bf16.mxu0 0
    %633 = vmatpush1.bf16.msra.mxu0 0
    %634 = vmatprep.subr.bf16.mxu0 0
    %635 = vmatpush1.bf16.msra.mxu0 0
    %636 = vmatprep.subr.bf16.mxu0 0
    %637 = vmatpush1.bf16.msra.mxu0 0
    %638 = vmatprep.subr.bf16.mxu0 0
    %639 = vmatpush1.bf16.msra.mxu0 0
    %640 = vmatprep.subr.bf16.mxu0 0
    %641 = vmatpush1.bf16.msra.mxu0 0
    %642 = vmatprep.subr.bf16.mxu0 0
    %643 = vmatpush1.bf16.msra.mxu0 0
    %644 = vmatprep.subr.bf16.mxu0 0
    %645 = vmatpush1.bf16.msra.mxu0 0
    %646 = vmatprep.mubr.bf16.mxu0 0
    %647 = vmatmul.mubr.bf16.gmra.mrb[0].mxu0 %v492
    %v648 = vpop.f32.mrb[0].mxu0
    %v649 = vadd.f32 %v609, %v648
    %v650 = vpop.f32.mrb[0].mxu0
    %v651 = vpop.f32.mrb[0].mxu0
    %v652 = vpop.f32.mrb[0].mxu0
    %653 = vdwg.mxu0
    %v654 = vmax.f32 %v649, 0.0
    %v655 = vpack.c.bf16 %v654, %v654
    %v656 = vld [vmem:[#allocation6] sm:$0xf]
    %v657 = vld [vmem:[#allocation6 + $0x4] sm:$0xf]
    %v658 = vld [vmem:[#allocation6 + $0x8] sm:$0xf]
    %v659 = vld [vmem:[#allocation6 + $0xc] sm:$0xf]
    %v660 = vld [vmem:[#allocation6 + $0x10] sm:$0xf]
    %v661 = vld [vmem:[#allocation6 + $0x14] sm:$0xf]
    %v662 = vld [vmem:[#allocation6 + $0x18] sm:$0xf]
    %v663 = vld [vmem:[#allocation6 + $0x1c] sm:$0xf]
    %v664 = vld [vmem:[#allocation6 + $0x20] sm:$0xf]
    %v665 = vld [vmem:[#allocation6 + $0x24] sm:$0xf]
    %v666 = vld [vmem:[#allocation6 + $0x28] sm:$0xf]
    %v667 = vld [vmem:[#allocation6 + $0x2c] sm:$0xf]
    %v668 = vld [vmem:[#allocation6 + $0x30] sm:$0xf]
    %v669 = vld [vmem:[#allocation6 + $0x34] sm:$0xf]
    %v670 = vld [vmem:[#allocation6 + $0x38] sm:$0xf]
    %v671 = vld [vmem:[#allocation6 + $0x3c] sm:$0xf]
    %v672 = vld [vmem:[%s4] sm:$0x1]
    %v674 = vlaneseq
    %v675 = vshrl.u32 %v674, 7
    %v676 = vsub.s32 0, %v675
    %v677 = vrot.slane %v672, %v676
    %v695 = vunpack.c.l.b16 %v656
    %v696 = vunpack.c.l.b16 %v657
    %v697 = vunpack.c.l.b16 %v658
    %v698 = vunpack.c.l.b16 %v659
    %v699 = vunpack.c.l.b16 %v660
    %v700 = vunpack.c.l.b16 %v661
    %v701 = vunpack.c.l.b16 %v662
    %v702 = vunpack.c.l.b16 %v663
    %v703 = vunpack.c.l.b16 %v664
    %v704 = vunpack.c.l.b16 %v665
    %v705 = vunpack.c.l.b16 %v666
    %v706 = vunpack.c.l.b16 %v667
    %v707 = vunpack.c.l.b16 %v668
    %v708 = vunpack.c.l.b16 %v669
    %v709 = vunpack.c.l.b16 %v670
    %v710 = vunpack.c.l.b16 %v671
    %v711 = vpack.c.b16 %v696, %v695
    %v712 = vpack.c.b16 %v698, %v697
    %v713 = vpack.c.b16 %v700, %v699
    %v714 = vpack.c.b16 %v702, %v701
    %v715 = vpack.c.b16 %v704, %v703
    %v716 = vpack.c.b16 %v706, %v705
    %v717 = vpack.c.b16 %v708, %v707
    %v718 = vpack.c.b16 %v710, %v709
    %727 = vmatprep.subr.bf16.mxu0 0
    %728 = vmatpush1.bf16.msra.mxu0 %v711
    %729 = vmatprep.subr.bf16.mxu0 0
    %730 = vmatpush1.bf16.msra.mxu0 %v712
    %731 = vmatprep.subr.bf16.mxu0 0
    %732 = vmatpush1.bf16.msra.mxu0 %v713
    %733 = vmatprep.subr.bf16.mxu0 0
    %734 = vmatpush1.bf16.msra.mxu0 %v714
    %735 = vmatprep.subr.bf16.mxu0 0
    %736 = vmatpush1.bf16.msra.mxu0 %v715
    %737 = vmatprep.subr.bf16.mxu0 0
    %738 = vmatpush1.bf16.msra.mxu0 %v716
    %739 = vmatprep.subr.bf16.mxu0 0
    %740 = vmatpush1.bf16.msra.mxu0 %v717
    %741 = vmatprep.subr.bf16.mxu0 0
    %742 = vmatpush1.bf16.msra.mxu0 %v718
    %743 = vmatprep.subr.bf16.mxu0 0
    %744 = vmatpush1.bf16.msra.mxu0 0
    %745 = vmatprep.subr.bf16.mxu0 0
    %746 = vmatpush1.bf16.msra.mxu0 0
    %747 = vmatprep.subr.bf16.mxu0 0
    %748 = vmatpush1.bf16.msra.mxu0 0
    %749 = vmatprep.subr.bf16.mxu0 0
    %750 = vmatpush1.bf16.msra.mxu0 0
    %751 = vmatprep.subr.bf16.mxu0 0
    %752 = vmatpush1.bf16.msra.mxu0 0
    %753 = vmatprep.subr.bf16.mxu0 0
    %754 = vmatpush1.bf16.msra.mxu0 0
    %755 = vmatprep.subr.bf16.mxu0 0
    %756 = vmatpush1.bf16.msra.mxu0 0
    %757 = vmatprep.subr.bf16.mxu0 0
    %758 = vmatpush1.bf16.msra.mxu0 0
    %759 = vmatprep.mubr.bf16.mxu0 0
    %760 = vmatmul.mubr.bf16.gmra.mrb[0].mxu0 %v655
    %v761 = vpop.f32.mrb[0].mxu0
    %v762 = vadd.f32 %v677, %v761
    %v763 = vpop.f32.mrb[0].mxu0
    %v764 = vpop.f32.mrb[0].mxu0
    %v765 = vpop.f32.mrb[0].mxu0
    %766 = vdwg.mxu0
    %v767 = vmax.f32 %v762, 0.0
    %v768 = vpack.c.bf16 %v767, %v767
    %v769 = vld [vmem:[#allocation7] sm:$0xf]
    %v770 = vld [vmem:[#allocation7 + $0x4] sm:$0xf]
    %v771 = vld [vmem:[#allocation7 + $0x8] sm:$0xf]
    %v772 = vld [vmem:[#allocation7 + $0xc] sm:$0xf]
    %v773 = vld [vmem:[#allocation7 + $0x10] sm:$0xf]
    %v774 = vld [vmem:[#allocation7 + $0x14] sm:$0xf]
    %v775 = vld [vmem:[#allocation7 + $0x18] sm:$0xf]
    %v776 = vld [vmem:[#allocation7 + $0x1c] sm:$0xf]
    %v777 = vld [vmem:[#allocation7 + $0x20] sm:$0xf]
    %v778 = vld [vmem:[#allocation7 + $0x24] sm:$0xf]
    %v779 = vld [vmem:[#allocation7 + $0x28] sm:$0xf]
    %v780 = vld [vmem:[#allocation7 + $0x2c] sm:$0xf]
    %v781 = vld [vmem:[#allocation7 + $0x30] sm:$0xf]
    %v782 = vld [vmem:[#allocation7 + $0x34] sm:$0xf]
    %v783 = vld [vmem:[#allocation7 + $0x38] sm:$0xf]
    %v784 = vld [vmem:[#allocation7 + $0x3c] sm:$0xf]
    %v801 = vunpack.c.l.b16 %v769
    %v802 = vunpack.c.l.b16 %v770
    %v803 = vunpack.c.l.b16 %v771
    %v804 = vunpack.c.l.b16 %v772
    %v805 = vunpack.c.l.b16 %v773
    %v806 = vunpack.c.l.b16 %v774
    %v807 = vunpack.c.l.b16 %v775
    %v808 = vunpack.c.l.b16 %v776
    %v809 = vunpack.c.l.b16 %v777
    %v810 = vunpack.c.l.b16 %v778
    %v811 = vunpack.c.l.b16 %v779
    %v812 = vunpack.c.l.b16 %v780
    %v813 = vunpack.c.l.b16 %v781
    %v814 = vunpack.c.l.b16 %v782
    %v815 = vunpack.c.l.b16 %v783
    %v816 = vunpack.c.l.b16 %v784
    %v817 = vpack.c.b16 %v802, %v801
    %v818 = vpack.c.b16 %v804, %v803
    %v819 = vpack.c.b16 %v806, %v805
    %v820 = vpack.c.b16 %v808, %v807
    %v821 = vpack.c.b16 %v810, %v809
    %v822 = vpack.c.b16 %v812, %v811
    %v823 = vpack.c.b16 %v814, %v813
    %v824 = vpack.c.b16 %v816, %v815
    %833 = vmatprep.subr.bf16.mxu0 0
    %834 = vmatpush1.bf16.msra.mxu0 %v817
    %835 = vmatprep.subr.bf16.mxu0 0
    %836 = vmatpush1.bf16.msra.mxu0 %v818
    %837 = vmatprep.subr.bf16.mxu0 0
    %838 = vmatpush1.bf16.msra.mxu0 %v819
    %839 = vmatprep.subr.bf16.mxu0 0
    %840 = vmatpush1.bf16.msra.mxu0 %v820
    %841 = vmatprep.subr.bf16.mxu0 0
    %842 = vmatpush1.bf16.msra.mxu0 %v821
    %843 = vmatprep.subr.bf16.mxu0 0
    %844 = vmatpush1.bf16.msra.mxu0 %v822
    %845 = vmatprep.subr.bf16.mxu0 0
    %846 = vmatpush1.bf16.msra.mxu0 %v823
    %847 = vmatprep.subr.bf16.mxu0 0
    %848 = vmatpush1.bf16.msra.mxu0 %v824
    %849 = vmatprep.subr.bf16.mxu0 0
    %850 = vmatpush1.bf16.msra.mxu0 0
    %851 = vmatprep.subr.bf16.mxu0 0
    %852 = vmatpush1.bf16.msra.mxu0 0
    %853 = vmatprep.subr.bf16.mxu0 0
    %854 = vmatpush1.bf16.msra.mxu0 0
    %855 = vmatprep.subr.bf16.mxu0 0
    %856 = vmatpush1.bf16.msra.mxu0 0
    %857 = vmatprep.subr.bf16.mxu0 0
    %858 = vmatpush1.bf16.msra.mxu0 0
    %859 = vmatprep.subr.bf16.mxu0 0
    %860 = vmatpush1.bf16.msra.mxu0 0
    %861 = vmatprep.subr.bf16.mxu0 0
    %862 = vmatpush1.bf16.msra.mxu0 0
    %863 = vmatprep.subr.bf16.mxu0 0
    %864 = vmatpush1.bf16.msra.mxu0 0
    %865 = vmatprep.mubr.bf16.mxu0 0
    %866 = vmatmul.mubr.bf16.gmra.mrb[0].mxu0 %v768
    %v867 = vpop.f32.mrb[0].mxu0
    %v868 = vadd.f32 0.0, %v867
    %v869 = vpop.f32.mrb[0].mxu0
    %v870 = vpop.f32.mrb[0].mxu0
    %v871 = vpop.f32.mrb[0].mxu0
    %872 = vdwg.mxu0
    %v873 = vpack.c.bf16 %v868, %v868
    %874 = vst [vmem:[%s6] sm:$0xf] %v873
    // Predicated region
    $region42: #{mlp_forward.1} parent=1 // pred_check
      _
    $region43: #{mlp_forward.1} parent=1 // pred_check_branch
      %876 = sbr.rel (0) target = $region45
    $region44: #{mlp_forward.1} parent=1 // pred_region
      _
    $region45: #{mlp_forward.1} parent=1 // pred_fallthru
      _
    // Predicated region
    $region46: #{mlp_forward.1} parent=1 // pred_check
      _
    $region47: #{mlp_forward.1} parent=1 // pred_check_branch
      %878 = sbr.rel (0) target = $region49
    $region48: #{mlp_forward.1} parent=1 // pred_region
      _
    $region49: #{mlp_forward.1} parent=1 // pred_fallthru
      _
    %879 = vsyncpa [#allocation3], 1
    %880 = vsyncpa [#allocation5], 1
    %881 = vsyncpa [#allocation8], 1

</llo_original>
